<compile_context>
chip_gen: v7x
topology: tpu7x:2x2x1
jax: 0.10.0
libtpu: 0.0.40
codegen_flags: <defaults>
</compile_context>

<pallas_src>
import jax
import jax.numpy as jnp
from jax.experimental import pallas as pl
from jax.experimental.pallas import tpu as pltpu

_LANE = 128
_SUBLANE = 8
_VMEM_BUDGET = 48 * 1024 * 1024  # conservative: fits v7x's 64 MiB physical VMEM


def _round_up(n: int, m: int) -> int:
    return ((n + m - 1) // m) * m


def _bspec(shape, index_map, buffers=None):
    """BlockSpec with an optional pipeline depth.

    Falls back to a plain BlockSpec if this JAX version does not support
    `pipeline_mode=pl.Buffered(n)`.
    """
    if buffers is not None and hasattr(pl, "Buffered"):
        try:
            return pl.BlockSpec(shape, index_map,
                                pipeline_mode=pl.Buffered(buffers))
        except TypeError:
            pass
    return pl.BlockSpec(shape, index_map)


def _choose_batch_tiling(B: int, max_tile: int):
    """Pick (TB, Bp) with Bp % TB == 0, low padding waste, >=2 steps when big."""
    B8 = _round_up(B, _SUBLANE)
    max_tile = max(_SUBLANE, _round_up(max_tile, _SUBLANE))
    if B8 <= max_tile:
        if B8 >= 256:
            # Split into >= 2 parallel grid steps so both v7x TensorCores work.
            tb = _round_up((B8 + 1) // 2, _SUBLANE)
            return tb, _round_up(B8, tb)
        return B8, B8
    # Largest tile with <= ~10% batch-padding waste.
    for tb in (max_tile, 2048, 1024, 512, 256, 128, 64, 32, 16, 8):
        if tb > max_tile or tb % _SUBLANE:
            continue
        bp = _round_up(B8, tb)
        if bp - B8 <= max(B8 // 10, _SUBLANE):
            return tb, bp
    return _SUBLANE, B8


def _mlp_kernel(x_ref, w1_ref, b1_ref, w2_ref, b2_ref, o_ref):
    # Cast x to bf16 in-register (VPU) -- no extra HBM pass in the wrapper.
    x = x_ref[...].astype(jnp.bfloat16)
    # fc1: (TB, K) @ (K, Hp) on the MXU, f32 accumulate.
    h = jnp.dot(x, w1_ref[...], preferred_element_type=jnp.float32)
    # bias add + ReLU in f32 on the VPU.
    h = jnp.maximum(h + b1_ref[...], 0.0)
    # fc2: (TB, Hp) @ (Hp, Np) on the MXU, f32 accumulate.
    y = jnp.dot(h.astype(jnp.bfloat16), w2_ref[...],
                preferred_element_type=jnp.float32)
    o_ref[...] = (y + b2_ref[...]).astype(o_ref.dtype)


def prepare_params(w1, b1, w2, b2):
    """One-time padding/casting of the parameters (hoisted out of the hot path).

    w1: (dim_in, n_hidden)   (= PyTorch fc1.weight.T)
    b1: (n_hidden,) or (1, n_hidden)
    w2: (n_hidden, dim_out)  (= PyTorch fc2.weight.T)
    b2: (dim_out,)  or (1, dim_out)
    """
    dim_in, n_hidden = w1.shape
    dim_out = w2.shape[1]
    Hp = _round_up(n_hidden, _LANE)
    Np = _round_up(dim_out, _LANE)

    bf16, f32 = jnp.bfloat16, jnp.float32
    w1p = jnp.pad(w1, ((0, 0), (0, Hp - n_hidden))).astype(bf16)
    b1p = jnp.pad(b1.reshape(1, -1), ((0, 0), (0, Hp - n_hidden))).astype(f32)
    w2p = jnp.pad(w2, ((0, Hp - n_hidden), (0, Np - dim_out))).astype(bf16)
    b2p = jnp.pad(b2.reshape(1, -1), ((0, 0), (0, Np - dim_out))).astype(f32)
    return dict(w1=w1p, b1=b1p, w2=w2p, b2=b2p,
                dim_in=dim_in, n_hidden=n_hidden, dim_out=dim_out)


def net_forward(x, params, *, tile_b: int = 1024, io_buffers: int = 2,
                out_dtype=None):
    """Forward pass of Net (fused 2-layer MLP) on padded/prepared params.

    x: (B, dim_in), any float dtype (f32 or bf16).  Returns (B, dim_out).
    """
    w1p, b1p, w2p, b2p = params["w1"], params["b1"], params["w2"], params["b2"]
    K = params["dim_in"]
    N = params["dim_out"]
    Hp = w1p.shape[1]
    Np = w2p.shape[1]
    B = x.shape[0]
    assert x.shape[1] == K, "x feature dim mismatch"
    out_dtype = x.dtype if out_dtype is None else out_dtype

    x_isz = jnp.dtype(x.dtype).itemsize
    o_isz = jnp.dtype(out_dtype).itemsize

    # Resident weights must fit VMEM (pessimistically assume double-buffered).
    w_bytes = 2 * ((K * Hp + Hp * Np) * 2 + (Hp + Np) * 4)
    if w_bytes > _VMEM_BUDGET:
        # TODO(synk): add a K/N-tiled fallback for layers whose weights exceed VMEM.
        raise ValueError("Net weights too large to keep fully VMEM-resident")

    def vmem_est(tb):
        return w_bytes + io_buffers * tb * (K * x_isz + Np * o_isz)

    B8 = _round_up(B, _SUBLANE)
    TB, Bp = _choose_batch_tiling(B, tile_b)
    while vmem_est(TB) > _VMEM_BUDGET and TB > _SUBLANE:
        TB = max(_SUBLANE, _round_up(TB // 2, _SUBLANE))
        Bp = _round_up(B8, TB)

    x_p = x if Bp == B else jnp.pad(x, ((0, Bp - B), (0, 0)))

    grid = (Bp // TB,)
    flops = 2 * Bp * (K * Hp + Hp * Np)
    bytes_accessed = (Bp * K * x_isz                # x stream
                      + (K * Hp + Hp * Np) * 2      # bf16 weights (once)
                      + (Hp + Np) * 4               # biases
                      + Bp * Np * o_isz)            # output stream
    vmem_limit = int(min(64 << 20, max(vmem_est(TB) + (4 << 20), 16 << 20)))

    out = pl.pallas_call(
        _mlp_kernel,
        out_shape=jax.ShapeDtypeStruct((Bp, Np), out_dtype),
        grid=grid,
        in_specs=[
            _bspec((TB, K), lambda i: (i, 0), io_buffers),  # x: batch-tiled
            _bspec((K, Hp), lambda i: (0, 0), 1),           # w1: resident, 1-buf
            _bspec((1, Hp), lambda i: (0, 0), 1),           # b1: resident, 1-buf
            _bspec((Hp, Np), lambda i: (0, 0), 1),          # w2: resident, 1-buf
            _bspec((1, Np), lambda i: (0, 0), 1),           # b2: resident, 1-buf
        ],
        out_specs=_bspec((TB, Np), lambda i: (i, 0), io_buffers),
        compiler_params=pltpu.CompilerParams(
            dimension_semantics=("parallel",),
            vmem_limit_bytes=vmem_limit,
        ),
        cost_estimate=pl.CostEstimate(
            flops=flops, transcendentals=0, bytes_accessed=bytes_accessed),
    )(x_p, w1p, b1p, w2p, b2p)

    if Bp == B and Np == N:
        return out                 # no padding -> no extra slice copy
    return out[:B, :N]


def init_params(key, dim_in, dim_out, n_hidden=128):
    """Deterministic init mimicking nn.Linear's U(-1/sqrt(fan_in), 1/sqrt(fan_in))."""
    k1, k2, k3, k4 = jax.random.split(key, 4)
    lim1 = 1.0 / jnp.sqrt(dim_in)
    lim2 = 1.0 / jnp.sqrt(n_hidden)
    # stored as (in_features, out_features) = weight.T of PyTorch
    w1 = jax.random.uniform(k1, (dim_in, n_hidden), jnp.float32, -lim1, lim1)
    b1 = jax.random.uniform(k2, (1, n_hidden), jnp.float32, -lim1, lim1)
    w2 = jax.random.uniform(k3, (n_hidden, dim_out), jnp.float32, -lim2, lim2)
    b2 = jax.random.uniform(k4, (1, dim_out), jnp.float32, -lim2, lim2)
    return w1, b1, w2, b2


if __name__ == "__main__":
    key = jax.random.PRNGKey(0)
    k_x, k_p = jax.random.split(key)

    batch, dim_in, dim_out, n_hidden = 8, 32, 8, 128
    x = jax.random.normal(k_x, (batch, dim_in), jnp.float32)
    w1, b1, w2, b2 = init_params(k_p, dim_in, dim_out, n_hidden)

    params = prepare_params(w1, b1, w2, b2)   # one-time pad + bf16 cast
    y = net_forward(x, params)
    y = jax.block_until_ready(y)
    assert y.shape == (batch, dim_out)
    assert y.dtype == jnp.float32

    # Reference 1: same bf16-operand / f32-accumulate math in plain JAX.
    bf16, f32 = jnp.bfloat16, jnp.float32
    h_ref = jnp.maximum(
        jnp.dot(x.astype(bf16), w1.astype(bf16), preferred_element_type=f32) + b1,
        0.0,
    )
    ref_bf16 = jnp.dot(h_ref.astype(bf16), w2.astype(bf16),
                       preferred_element_type=f32) + b2
    assert jnp.allclose(y, ref_bf16, atol=2e-3, rtol=2e-3), (
        jnp.max(jnp.abs(y - ref_bf16)))

    # Reference 2: full f32 PyTorch-equivalent math (loose tol: bf16 operands).
    ref_f32 = jnp.maximum(x @ w1 + b1, 0.0) @ w2 + b2
    assert jnp.allclose(y, ref_f32, atol=5e-2, rtol=5e-2), (
        jnp.max(jnp.abs(y - ref_f32)))

    print("KERNEL_OK")
</pallas_src>

<mosaic_0001>
module attributes {stable_mosaic.version = 11 : i64} {
  func.func @_mlp_kernel(%arg0: i32, %arg1: memref<8x32xf32, #tpu.memory_space<vmem>>, %arg2: memref<32x128xbf16, #tpu.memory_space<vmem>>, %arg3: memref<1x128xf32, #tpu.memory_space<vmem>>, %arg4: memref<128x128xbf16, #tpu.memory_space<vmem>>, %arg5: memref<1x128xf32, #tpu.memory_space<vmem>>, %arg6: memref<8x128xf32, #tpu.memory_space<vmem>>) attributes {dimension_semantics = [#tpu.dimension_semantics<parallel>], iteration_bounds = array<i64: 1>, scalar_prefetch = 0 : i64, scratch_operands = 0 : i64, tpu.core_type = #tpu.core_type<tc>, window_params = [{pipeline_mode = #tpu.pipeline_mode<double_buffered>, transform_indices = @transform_0, window_bounds = array<i64: 8, 32>}, {pipeline_mode = #tpu.pipeline_mode<synchronous>, transform_indices = @transform_1, window_bounds = array<i64: 32, 128>}, {pipeline_mode = #tpu.pipeline_mode<synchronous>, transform_indices = @transform_2, window_bounds = array<i64: 1, 128>}, {pipeline_mode = #tpu.pipeline_mode<synchronous>, transform_indices = @transform_3, window_bounds = array<i64: 128, 128>}, {pipeline_mode = #tpu.pipeline_mode<synchronous>, transform_indices = @transform_4, window_bounds = array<i64: 1, 128>}, {pipeline_mode = #tpu.pipeline_mode<double_buffered>, transform_indices = @transform_5, window_bounds = array<i64: 8, 128>}]} {
    %c0 = arith.constant 0 : index
    %c0_0 = arith.constant 0 : index
    %0 = vector.load %arg1[%c0, %c0_0] : memref<8x32xf32, #tpu.memory_space<vmem>>, vector<8x32xf32>
    %1 = arith.truncf %0 : vector<8x32xf32> to vector<8x32xbf16>
    %c0_1 = arith.constant 0 : index
    %c0_2 = arith.constant 0 : index
    %2 = vector.load %arg2[%c0_1, %c0_2] : memref<32x128xbf16, #tpu.memory_space<vmem>>, vector<32x128xbf16>
    %cst = arith.constant dense<0.000000e+00> : vector<8x128xf32>
    %3 = tpu.matmul %1, %2, %cst {dimension_numbers = #tpu.dot_dimension_numbers<[1], [0], [0], [1], [0, 0, 1, 1], [], []>} : vector<8x32xbf16>, vector<32x128xbf16>, vector<8x128xf32> -> vector<8x128xf32>
    %c0_3 = arith.constant 0 : index
    %c0_4 = arith.constant 0 : index
    %4 = vector.load %arg3[%c0_3, %c0_4] : memref<1x128xf32, #tpu.memory_space<vmem>>, vector<1x128xf32>
    %5 = vector.broadcast %4 : vector<1x128xf32> to vector<8x128xf32>
    %6 = arith.addf %3, %5 : vector<8x128xf32>
    %cst_5 = arith.constant 0.000000e+00 : f32
    %7 = vector.broadcast %cst_5 : f32 to vector<8x128xf32>
    %8 = arith.maximumf %6, %7 : vector<8x128xf32>
    %9 = arith.truncf %8 : vector<8x128xf32> to vector<8x128xbf16>
    %c0_6 = arith.constant 0 : index
    %c0_7 = arith.constant 0 : index
    %10 = vector.load %arg4[%c0_6, %c0_7] : memref<128x128xbf16, #tpu.memory_space<vmem>>, vector<128x128xbf16>
    %cst_8 = arith.constant dense<0.000000e+00> : vector<8x128xf32>
    %11 = tpu.matmul %9, %10, %cst_8 {dimension_numbers = #tpu.dot_dimension_numbers<[1], [0], [0], [1], [0, 0, 1, 1], [], []>} : vector<8x128xbf16>, vector<128x128xbf16>, vector<8x128xf32> -> vector<8x128xf32>
    %c0_9 = arith.constant 0 : index
    %c0_10 = arith.constant 0 : index
    %12 = vector.load %arg5[%c0_9, %c0_10] : memref<1x128xf32, #tpu.memory_space<vmem>>, vector<1x128xf32>
    %13 = vector.broadcast %12 : vector<1x128xf32> to vector<8x128xf32>
    %14 = arith.addf %11, %13 : vector<8x128xf32>
    %c0_11 = arith.constant 0 : index
    %c0_12 = arith.constant 0 : index
    %15 = vector.load %arg6[%c0_11, %c0_12] : memref<8x128xf32, #tpu.memory_space<vmem>>, vector<8x128xf32>
    tpu.vector_store %arg6[%c0_11, %c0_12], %14 {strides = array<i32>} : memref<8x128xf32, #tpu.memory_space<vmem>>, vector<8x128xf32>,
    return
  }
  func.func @transform_0(%arg0: i32) -> (i32, i32) {
    %c0_i32 = arith.constant 0 : i32
    %c0_i32_0 = arith.constant 0 : i32
    return %arg0, %c0_i32 : i32, i32
  }
  func.func @transform_1(%arg0: i32) -> (i32, i32) {
    %c0_i32 = arith.constant 0 : i32
    %c0_i32_0 = arith.constant 0 : i32
    %c0_i32_1 = arith.constant 0 : i32
    return %c0_i32, %c0_i32_0 : i32, i32
  }
  func.func @transform_2(%arg0: i32) -> (i32, i32) {
    %c0_i32 = arith.constant 0 : i32
    %c0_i32_0 = arith.constant 0 : i32
    %c0_i32_1 = arith.constant 0 : i32
    return %c0_i32, %c0_i32_0 : i32, i32
  }
  func.func @transform_3(%arg0: i32) -> (i32, i32) {
    %c0_i32 = arith.constant 0 : i32
    %c0_i32_0 = arith.constant 0 : i32
    %c0_i32_1 = arith.constant 0 : i32
    return %c0_i32, %c0_i32_0 : i32, i32
  }
  func.func @transform_4(%arg0: i32) -> (i32, i32) {
    %c0_i32 = arith.constant 0 : i32
    %c0_i32_0 = arith.constant 0 : i32
    %c0_i32_1 = arith.constant 0 : i32
    return %c0_i32, %c0_i32_0 : i32, i32
  }
  func.func @transform_5(%arg0: i32) -> (i32, i32) {
    %c0_i32 = arith.constant 0 : i32
    %c0_i32_0 = arith.constant 0 : i32
    return %arg0, %c0_i32 : i32, i32
  }
}

</mosaic_0001>

<llo_original>
// kernel: tpu_custom_call.1
$region0: #{tpu_custom_call.1}
  #allocation0 [shape = 'u32[]', space=smem, size = 0x4, offset = 0x4, fixed_abs, tag = 'smem constant byte address 0x4 - core index']
  #allocation1 [shape = 'u32[144,128]{1,0:T(1,128)}', space=vmem, size = 0x12000, scoped, tag = 'internal scratch']
  %s0 = inlined_call_operand.hbm [shape: f32[8,32], index: 0, kind: input, shape index: {}]
  %s1 = inlined_call_operand.hbm [shape: bf16[32,128], index: 1, kind: input, shape index: {}]
  %s2 = inlined_call_operand.vmem [shape: f32[1,128], index: 2, kind: input, shape index: {}]
  %s3 = inlined_call_operand.hbm [shape: bf16[128,128], index: 3, kind: input, shape index: {}]
  %s4 = inlined_call_operand.vmem [shape: f32[1,128], index: 4, kind: input, shape index: {}]
  %s5 = inlined_call_operand.hbm [shape: f32[8,128], index: 5, kind: output, shape index: {}]
  %s6 = sld [smem:[#allocation0]]
  $region42: #{tpu_custom_call.1} parent=0
    _
  %s8 = ssub.s32 1, %s6
  %s9 = scalar_select 0, %s8, %s6
  $region1: #{tpu_custom_call.1} parent=0
    #allocation2 [shape = 'u8[4096]{0}', space=vmem, size = 0x1000, scoped, tag = 'input window, operand 0, single buffered']
    #allocation3 [shape = 's32[1]{0}', space=sflag, size = 0x4, scoped, tag = 'scoped memory for tpu_custom_call.1']
    #allocation4 [shape = 's32[1]{0}', space=sflag, size = 0x4, scoped, tag = 'scoped memory for tpu_custom_call.1']
    #allocation5 [shape = 'u8[8192]{0}', space=vmem, size = 0x2000, scoped, tag = 'input window, operand 1, single buffered']
    #allocation6 [shape = 's32[1]{0}', space=sflag, size = 0x4, scoped, tag = 'scoped memory for tpu_custom_call.1']
    #allocation7 [shape = 'u8[32768]{0}', space=vmem, size = 0x8000, scoped, tag = 'input window, operand 3, single buffered']
    #allocation8 [shape = 'u8[4096]{0}', space=vmem, size = 0x1000, scoped, tag = 'output window, operand 0, single buffered']
    %10 = vsyncpa [#allocation3], 0
    %11 = vsyncpa [#allocation6], 0
    %12 = vsyncpa [#allocation4], 0
    // Predicated region
    $region2: #{tpu_custom_call.1} parent=1 // pred_check
      _
    $region3: #{tpu_custom_call.1} parent=1 // pred_check_branch
      %14 = sbr.rel (0) target = $region5
    $region4: #{tpu_custom_call.1} parent=1 // pred_region
      %s16 = ssub.s32 128, 128
      %17 = vsyncadd [#allocation3], %s16
      %s19 = sshll.u32 [#allocation2], 4
      %s20 = int_to_ptr.vmem [resolvable:$true] %s19
      %22 = dma.hbm_to_vmem [thread:$0]  %s0, 128, %s20, [#allocation3]
    $region5: #{tpu_custom_call.1} parent=1 // pred_fallthru
      _
    // Predicated region
    $region6: #{tpu_custom_call.1} parent=1 // pred_check
      _
    $region7: #{tpu_custom_call.1} parent=1 // pred_check_branch
      %24 = sbr.rel (0) target = $region9
    $region8: #{tpu_custom_call.1} parent=1 // pred_region
      %s26 = ssub.s32 256, 256
      %27 = vsyncadd [#allocation6], %s26
      %s28 = sshll.u32 [#allocation5], 4
      %s29 = int_to_ptr.vmem [resolvable:$true] %s28
      %34 = dma.hbm_to_vmem [thread:$0]  %s1, 256, %s29, [#allocation6], 64, 64, 4
    $region9: #{tpu_custom_call.1} parent=1 // pred_fallthru
      _
    // Predicated region
    $region10: #{tpu_custom_call.1} parent=1 // pred_check
      _
    $region11: #{tpu_custom_call.1} parent=1 // pred_check_branch
      %36 = sbr.rel (0) target = $region13
    $region12: #{tpu_custom_call.1} parent=1 // pred_region
      _
    $region13: #{tpu_custom_call.1} parent=1 // pred_fallthru
      _
    // Predicated region
    $region14: #{tpu_custom_call.1} parent=1 // pred_check
      _
    $region15: #{tpu_custom_call.1} parent=1 // pred_check_branch
      %38 = sbr.rel (0) target = $region17
    $region16: #{tpu_custom_call.1} parent=1 // pred_region
      %s40 = ssub.s32 1024, 1024
      %41 = vsyncadd [#allocation6], %s40
      %s42 = sshll.u32 [#allocation7], 4
      %s43 = int_to_ptr.vmem [resolvable:$true] %s42
      %48 = dma.hbm_to_vmem [thread:$0]  %s3, 1024, %s43, [#allocation6], 64, 64, 4
    $region17: #{tpu_custom_call.1} parent=1 // pred_fallthru
      _
    // Predicated region
    $region18: #{tpu_custom_call.1} parent=1 // pred_check
      _
    $region19: #{tpu_custom_call.1} parent=1 // pred_check_branch
      %50 = sbr.rel (0) target = $region21
    $region20: #{tpu_custom_call.1} parent=1 // pred_region
      _
    $region21: #{tpu_custom_call.1} parent=1 // pred_fallthru
      _
    // Predicated region
    $region22: #{tpu_custom_call.1} parent=1 // pred_check
      _
    $region23: #{tpu_custom_call.1} parent=1 // pred_check_branch
      %52 = sbr.rel (0) target = $region25
    $region24: #{tpu_custom_call.1} parent=1 // pred_region
      %53 = dma.done [#allocation3], 128
    $region25: #{tpu_custom_call.1} parent=1 // pred_fallthru
      _
    // Predicated region
    $region26: #{tpu_custom_call.1} parent=1 // pred_check
      _
    $region27: #{tpu_custom_call.1} parent=1 // pred_check_branch
      %55 = sbr.rel (0) target = $region29
    $region28: #{tpu_custom_call.1} parent=1 // pred_region
      %56 = dma.done [#allocation6], 256
    $region29: #{tpu_custom_call.1} parent=1 // pred_fallthru
      _
    // Predicated region
    $region30: #{tpu_custom_call.1} parent=1 // pred_check
      _
    $region31: #{tpu_custom_call.1} parent=1 // pred_check_branch
      %58 = sbr.rel (0) target = $region33
    $region32: #{tpu_custom_call.1} parent=1 // pred_region
      %59 = dma.done [#allocation6], 1024
    $region33: #{tpu_custom_call.1} parent=1 // pred_fallthru
      _
    %v61 = vld [vmem:[#allocation2] sm:$0xff]
    %v62 = vpack.c.bf16 %v61, %v61
    %v63 = vld [vmem:[#allocation5] sm:$0xf]
    %v64 = vld [vmem:[#allocation5 + $0x4] sm:$0xf]
    %v65 = vld [vmem:[#allocation5 + $0x8] sm:$0xf]
    %v66 = vld [vmem:[#allocation5 + $0xc] sm:$0xf]
    %v67 = vld [vmem:[%s2] sm:$0x1]
    %v69 = vlaneseq
    %v70 = vshrl.u32 %v69, 7
    %v71 = vsub.s32 0, %v70
    %v72 = vrot.slane %v67, %v71
    %v78 = vunpack.c.l.b16 %v63
    %v79 = vunpack.c.l.b16 %v64
    %v80 = vunpack.c.l.b16 %v65
    %v81 = vunpack.c.l.b16 %v66
    %v82 = vpack.c.b16 %v79, %v78
    %v83 = vpack.c.b16 %v81, %v80
    %vm86 = vcmask 261120
    %v88 = vsel %vm86, %v62, 0
    %90 = vmatprep.subr.bf16.mxu0 0
    %91 = vmatpush1.bf16.msra.mxu0 %v82
    %92 = vmatprep.subr.bf16.mxu0 0
    %93 = vmatpush1.bf16.msra.mxu0 %v83
    %94 = vmatprep.subr.bf16.mxu0 0
    %95 = vmatpush1.bf16.msra.mxu0 0
    %96 = vmatprep.subr.bf16.mxu0 0
    %97 = vmatpush1.bf16.msra.mxu0 0
    %98 = vmatprep.subr.bf16.mxu0 0
    %99 = vmatpush1.bf16.msra.mxu0 0
    %100 = vmatprep.subr.bf16.mxu0 0
    %101 = vmatpush1.bf16.msra.mxu0 0
    %102 = vmatprep.subr.bf16.mxu0 0
    %103 = vmatpush1.bf16.msra.mxu0 0
    %104 = vmatprep.subr.bf16.mxu0 0
    %105 = vmatpush1.bf16.msra.mxu0 0
    %106 = vmatprep.subr.bf16.mxu0 0
    %107 = vmatpush1.bf16.msra.mxu0 0
    %108 = vmatprep.subr.bf16.mxu0 0
    %109 = vmatpush1.bf16.msra.mxu0 0
    %110 = vmatprep.subr.bf16.mxu0 0
    %111 = vmatpush1.bf16.msra.mxu0 0
    %112 = vmatprep.subr.bf16.mxu0 0
    %113 = vmatpush1.bf16.msra.mxu0 0
    %114 = vmatprep.subr.bf16.mxu0 0
    %115 = vmatpush1.bf16.msra.mxu0 0
    %116 = vmatprep.subr.bf16.mxu0 0
    %117 = vmatpush1.bf16.msra.mxu0 0
    %118 = vmatprep.subr.bf16.mxu0 0
    %119 = vmatpush1.bf16.msra.mxu0 0
    %120 = vmatprep.subr.bf16.mxu0 0
    %121 = vmatpush1.bf16.msra.mxu0 0
    %122 = vmatprep.mubr.bf16.mxu0 0
    %123 = vmatmul.mubr.bf16.gmra.mrb[0].mxu0 %v88
    %v124 = vpop.f32.mrb[0].mxu0
    %v125 = vadd.f32 %v72, %v124
    %v126 = vpop.f32.mrb[0].mxu0
    %v127 = vpop.f32.mrb[0].mxu0
    %v128 = vpop.f32.mrb[0].mxu0
    %129 = vdwg.mxu0
    %v130 = vmax.f32 %v125, 0.0
    %v131 = vpack.c.bf16 %v130, %v130
    %v132 = vld [vmem:[#allocation7] sm:$0xf]
    %v133 = vld [vmem:[#allocation7 + $0x4] sm:$0xf]
    %v134 = vld [vmem:[#allocation7 + $0x8] sm:$0xf]
    %v135 = vld [vmem:[#allocation7 + $0xc] sm:$0xf]
    %v136 = vld [vmem:[#allocation7 + $0x10] sm:$0xf]
    %v137 = vld [vmem:[#allocation7 + $0x14] sm:$0xf]
    %v138 = vld [vmem:[#allocation7 + $0x18] sm:$0xf]
    %v139 = vld [vmem:[#allocation7 + $0x1c] sm:$0xf]
    %v140 = vld [vmem:[#allocation7 + $0x20] sm:$0xf]
    %v141 = vld [vmem:[#allocation7 + $0x24] sm:$0xf]
    %v142 = vld [vmem:[#allocation7 + $0x28] sm:$0xf]
    %v143 = vld [vmem:[#allocation7 + $0x2c] sm:$0xf]
    %v144 = vld [vmem:[#allocation7 + $0x30] sm:$0xf]
    %v145 = vld [vmem:[#allocation7 + $0x34] sm:$0xf]
    %v146 = vld [vmem:[#allocation7 + $0x38] sm:$0xf]
    %v147 = vld [vmem:[#allocation7 + $0x3c] sm:$0xf]
    %v148 = vld [vmem:[%s4] sm:$0x1]
    %v150 = vlaneseq
    %v151 = vshrl.u32 %v150, 7
    %v152 = vsub.s32 0, %v151
    %v153 = vrot.slane %v148, %v152
    %v171 = vunpack.c.l.b16 %v132
    %v172 = vunpack.c.l.b16 %v133
    %v173 = vunpack.c.l.b16 %v134
    %v174 = vunpack.c.l.b16 %v135
    %v175 = vunpack.c.l.b16 %v136
    %v176 = vunpack.c.l.b16 %v137
    %v177 = vunpack.c.l.b16 %v138
    %v178 = vunpack.c.l.b16 %v139
    %v179 = vunpack.c.l.b16 %v140
    %v180 = vunpack.c.l.b16 %v141
    %v181 = vunpack.c.l.b16 %v142
    %v182 = vunpack.c.l.b16 %v143
    %v183 = vunpack.c.l.b16 %v144
    %v184 = vunpack.c.l.b16 %v145
    %v185 = vunpack.c.l.b16 %v146
    %v186 = vunpack.c.l.b16 %v147
    %v187 = vpack.c.b16 %v172, %v171
    %v188 = vpack.c.b16 %v174, %v173
    %v189 = vpack.c.b16 %v176, %v175
    %v190 = vpack.c.b16 %v178, %v177
    %v191 = vpack.c.b16 %v180, %v179
    %v192 = vpack.c.b16 %v182, %v181
    %v193 = vpack.c.b16 %v184, %v183
    %v194 = vpack.c.b16 %v186, %v185
    %203 = vmatprep.subr.bf16.mxu0 0
    %204 = vmatpush1.bf16.msra.mxu0 %v187
    %205 = vmatprep.subr.bf16.mxu0 0
    %206 = vmatpush1.bf16.msra.mxu0 %v188
    %207 = vmatprep.subr.bf16.mxu0 0
    %208 = vmatpush1.bf16.msra.mxu0 %v189
    %209 = vmatprep.subr.bf16.mxu0 0
    %210 = vmatpush1.bf16.msra.mxu0 %v190
    %211 = vmatprep.subr.bf16.mxu0 0
    %212 = vmatpush1.bf16.msra.mxu0 %v191
    %213 = vmatprep.subr.bf16.mxu0 0
    %214 = vmatpush1.bf16.msra.mxu0 %v192
    %215 = vmatprep.subr.bf16.mxu0 0
    %216 = vmatpush1.bf16.msra.mxu0 %v193
    %217 = vmatprep.subr.bf16.mxu0 0
    %218 = vmatpush1.bf16.msra.mxu0 %v194
    %219 = vmatprep.subr.bf16.mxu0 0
    %220 = vmatpush1.bf16.msra.mxu0 0
    %221 = vmatprep.subr.bf16.mxu0 0
    %222 = vmatpush1.bf16.msra.mxu0 0
    %223 = vmatprep.subr.bf16.mxu0 0
    %224 = vmatpush1.bf16.msra.mxu0 0
    %225 = vmatprep.subr.bf16.mxu0 0
    %226 = vmatpush1.bf16.msra.mxu0 0
    %227 = vmatprep.subr.bf16.mxu0 0
    %228 = vmatpush1.bf16.msra.mxu0 0
    %229 = vmatprep.subr.bf16.mxu0 0
    %230 = vmatpush1.bf16.msra.mxu0 0
    %231 = vmatprep.subr.bf16.mxu0 0
    %232 = vmatpush1.bf16.msra.mxu0 0
    %233 = vmatprep.subr.bf16.mxu0 0
    %234 = vmatpush1.bf16.msra.mxu0 0
    %235 = vmatprep.mubr.bf16.mxu0 0
    %236 = vmatmul.mubr.bf16.gmra.mrb[0].mxu0 %v131
    %v237 = vpop.f32.mrb[0].mxu0
    %v238 = vadd.f32 %v153, %v237
    %v239 = vpop.f32.mrb[0].mxu0
    %v240 = vpop.f32.mrb[0].mxu0
    %v241 = vpop.f32.mrb[0].mxu0
    %242 = vdwg.mxu0
    %243 = vst [vmem:[#allocation8] sm:$0xff] %v238
    // Predicated region
    $region34: #{tpu_custom_call.1} parent=1 // pred_check
      _
    $region35: #{tpu_custom_call.1} parent=1 // pred_check_branch
      %245 = sbr.rel (0) target = $region37
    $region36: #{tpu_custom_call.1} parent=1 // pred_region
      %s247 = ssub.s32 128, 128
      %248 = vsyncadd [#allocation4], %s247
      %s250 = sshll.u32 [#allocation8], 4
      %s251 = int_to_ptr.vmem [resolvable:$true] %s250
      %253 = dma.vmem_to_hbm [thread:$0]  %s251, 128, %s5, [#allocation4]
    $region37: #{tpu_custom_call.1} parent=1 // pred_fallthru
      _
    // Predicated region
    $region38: #{tpu_custom_call.1} parent=1 // pred_check
      _
    $region39: #{tpu_custom_call.1} parent=1 // pred_check_branch
      %255 = sbr.rel (0) target = $region41
    $region40: #{tpu_custom_call.1} parent=1 // pred_region
      %256 = dma.done [#allocation4], 128
    $region41: #{tpu_custom_call.1} parent=1 // pred_fallthru
      _
    %257 = vsyncpa [#allocation3], 1
    %258 = vsyncpa [#allocation6], 1
    %259 = vsyncpa [#allocation4], 1

</llo_original>
